<compile_context>
chip_gen: v6e
topology: v6e:2x2x1
jax: 0.10.0
libtpu: 0.0.40
codegen_flags: <defaults>
</compile_context>

<pallas_src>
import jax
import jax.numpy as jnp
from jax.experimental import pallas as pl
from jax.experimental.pallas import tpu as pltpu

_LANE = 128


def _round_up(n, m):
    return ((n + m - 1) // m) * m


def _largest_divisor_leq(n, cap):
    cap = max(1, min(cap, n))
    for c in range(cap, 0, -1):
        if n % c == 0:
            return c
    return 1


# ---------------------------------------------------------------------------
# Kernel 1: chunked global-average-pool + fused (vision ++ language) projection
# ---------------------------------------------------------------------------
def _pool_project_kernel(img_ref, txt_ref, wv_ref, wl_ref, b_ref,
                         emb_ref, pool_acc):
    j = pl.program_id(1)

    @pl.when(j == 0)
    def _():
        pool_acc[...] = jnp.zeros_like(pool_acc)

    # Lane-preserving partial sums: static, 128-aligned lane slices -> pure VPU
    # adds into the (tb, Cp, 128) f32 scratch.  No per-chunk cross-lane reduce.
    x = img_ref[...].astype(jnp.float32)                       # (tb, Cp, thw) bf16 -> f32
    acc = pool_acc[...]
    for s in range(x.shape[-1] // _LANE):
        acc = acc + x[:, :, s * _LANE:(s + 1) * _LANE]
    pool_acc[...] = acc

    @pl.when(j == pl.num_programs(1) - 1)
    def _():
        # One 128->1 lane reduce per batch block (XLU), then two MXU dots.
        pooled = jnp.sum(pool_acc[...], axis=2)                # (tb, Cp) spatial SUM
        txt = txt_ref[...].astype(jnp.float32)                 # (tb, S*E)
        # 1/HW, sublane packing, and the 1/S sequence-mean are folded into the
        # column-padded weights host-side; no concat -> no lane relayout, and
        # the (tb, Dpad) output store is lane-dense (unmasked vst).
        emb = (jnp.dot(pooled, wv_ref[...], preferred_element_type=jnp.float32)
               + jnp.dot(txt, wl_ref[...], preferred_element_type=jnp.float32)
               + b_ref[...])
        emb_ref[...] = emb.astype(emb_ref.dtype)


# ---------------------------------------------------------------------------
# Kernel 2: classifier head (full batch: BN -> MLP -> Softmax)
# ---------------------------------------------------------------------------
def _head_kernel(x_ref, gamma_ref, beta_ref, w1_ref, b1_ref, w2_ref, b2_ref,
                 out_ref):
    x = x_ref[...].astype(jnp.float32)

    # BatchNorm1d (training-mode biased batch statistics, affine).
    # Padded feature columns are exactly zero -> normalize to zero -> killed by
    # the zero-padded rows of w1, so they never affect the logits.
    mu = jnp.mean(x, axis=0, keepdims=True)
    var = jnp.mean((x - mu) ** 2, axis=0, keepdims=True)
    x = (x - mu) * jax.lax.rsqrt(var + 1e-5) * gamma_ref[...] + beta_ref[...]

    # Linear -> ReLU
    h = jnp.dot(x, w1_ref[...], preferred_element_type=jnp.float32) + b1_ref[...]
    h = jnp.maximum(h, 0.0)

    # Linear -> ReLU
    h = jnp.dot(h, w2_ref[...], preferred_element_type=jnp.float32) + b2_ref[...]
    h = jnp.maximum(h, 0.0)

    # Softmax(dim=1); EUP approx reciprocal for the denominator (free slot).
    m = jnp.max(h, axis=1, keepdims=True)
    e = jnp.exp(h - m)
    denom = jnp.sum(e, axis=1, keepdims=True)
    out_ref[...] = (e * pl.reciprocal(denom, approx=True)).astype(out_ref.dtype)


# ---------------------------------------------------------------------------
# Wrapper
# ---------------------------------------------------------------------------
def model_forward(img_x, txt_x, params):
    """img_x: [B, C, H, W] float32 (NCHW), txt_x: [B, S, E] float32."""
    B, C, H, W = img_x.shape
    _, S, E = txt_x.shape
    HW = H * W
    SE = S * E

    d_vis = params["wv"].shape[1]
    d_lang = params["wl"].shape[1]
    D = d_vis + d_lang                      # fc_size[0]
    Dpad = _round_up(D, _LANE)              # lane-dense projection output
    h1 = params["w1"].shape[1]
    n_classes = params["w2"].shape[1]

    # ---- batch tile: fill MXU rows, but keep >= 2 batch blocks so the second
    # TensorCore on v7x has work (batch is the "parallel" grid axis). ----
    tb = _largest_divisor_leq(B, 256)
    if B // tb < 2 and B >= 2:
        tb = _largest_divisor_leq(B, B // 2)
    nb = B // tb

    # ---- sublane packing: C << 8 pads every vreg/VMEM tile; pack k spatial
    # groups onto the sublane axis (pure view-reshape on the host). ----
    kpack = max(1, 8 // C) if C <= 8 else 1
    if HW % kpack != 0:
        kpack = 1
    Cp = C * kpack
    HWp = HW // kpack

    # ---- spatial chunk from an explicit VMEM budget (v7x 64 MiB vs
    # v5e/v6e 128 MiB); bigger chunks amortize per-step overhead. ----
    try:
        vmem_cap = int(pltpu.get_tpu_info().vmem_capacity_bytes)
    except Exception:
        vmem_cap = 64 * 1024 * 1024  # conservative (v7x-sized) fallback
    vmem_limit = min(int(vmem_cap * 0.75), 96 * 1024 * 1024)
    img_budget = int(vmem_limit * 0.6)           # double-buffered bf16 image tiles
    per_lane_bytes = 2 * tb * Cp * 2             # 2 buffers x tb x Cp x 2 B
    thw = max(_LANE, (img_budget // per_lane_bytes) // _LANE * _LANE)
    thw = min(thw, _round_up(HWp, _LANE))
    HWpad = _round_up(HWp, thw)                  # zero-pad: exact, divisor is real HW
    nhw = HWpad // thw

    # ---- host-side input prep: bf16 stream + sublane packing + padding ----
    img_p = img_x.reshape(B, Cp, HWp).astype(jnp.bfloat16)
    if HWpad != HWp:
        img_p = jnp.pad(img_p, ((0, 0), (0, 0), (0, HWpad - HWp)))
    txt_p = txt_x.reshape(B, SE).astype(jnp.bfloat16)

    # ---- fused projection weights (tiny, kept f32): fold 1/HW + channel
    # packing into wv, the sequence mean (1/S) into wl, pad columns to Dpad ----
    wv_k = jnp.repeat(params["wv"], kpack, axis=0) * (1.0 / HW)      # (Cp, d_vis)
    wl_k = jnp.tile(params["wl"], (S, 1)) * (1.0 / S)                # (SE, d_lang)
    wv_full = jnp.zeros((Cp, Dpad), jnp.float32).at[:, :d_vis].set(wv_k)
    wl_full = jnp.zeros((SE, Dpad), jnp.float32).at[:, d_vis:D].set(wl_k)
    b_full = (jnp.zeros((1, Dpad), jnp.float32)
              .at[:, :d_vis].set(params["bv"])
              .at[:, d_vis:D].set(params["bl"]))

    # ---- kernel 1: gridded pooled-feature / projection kernel ----
    bk_flops = B * Cp * HWpad + 2 * B * (Cp + SE) * Dpad
    bk_bytes = 2 * (B * Cp * HWpad + B * SE) + 4 * ((Cp + SE + 1) * Dpad + B * Dpad)
    emb = pl.pallas_call(
        _pool_project_kernel,
        out_shape=jax.ShapeDtypeStruct((B, Dpad), jnp.float32),
        grid_spec=pltpu.PrefetchScalarGridSpec(
            num_scalar_prefetch=0,
            grid=(nb, nhw),
            in_specs=[
                pl.BlockSpec((tb, Cp, thw), lambda i, j: (i, 0, j)),   # image (bf16)
                pl.BlockSpec((tb, SE), lambda i, j: (i, 0)),           # text  (bf16)
                pl.BlockSpec((Cp, Dpad), lambda i, j: (0, 0)),         # vis weight
                pl.BlockSpec((SE, Dpad), lambda i, j: (0, 0)),         # lang weight
                pl.BlockSpec((1, Dpad), lambda i, j: (0, 0)),          # fused bias
            ],
            out_specs=pl.BlockSpec((tb, Dpad), lambda i, j: (i, 0)),
            scratch_shapes=[pltpu.VMEM((tb, Cp, _LANE), jnp.float32)],
        ),
        compiler_params=pltpu.CompilerParams(
            dimension_semantics=("parallel", "arbitrary"),
            vmem_limit_bytes=int(vmem_limit),
        ),
        cost_estimate=pl.CostEstimate(
            flops=int(bk_flops), transcendentals=0,
            bytes_accessed=int(bk_bytes)),
    )(img_p, txt_p, wv_full, wl_full, b_full)

    # ---- kernel 2: tiny single-invocation head (full-batch BN stats) ----
    gamma_p = jnp.ones((1, Dpad), jnp.float32).at[:, :D].set(params["gamma"])
    beta_p = jnp.zeros((1, Dpad), jnp.float32).at[:, :D].set(params["beta"])
    w1_p = jnp.zeros((Dpad, h1), jnp.float32).at[:D, :].set(params["w1"])

    vmem = pl.BlockSpec(memory_space=pltpu.MemorySpace.VMEM)
    hd_flops = 2 * B * Dpad * h1 + 2 * B * h1 * n_classes + 10 * B * Dpad
    hd_bytes = 4 * (B * Dpad + Dpad * h1 + h1 * n_classes + B * n_classes + 4 * Dpad)
    out = pl.pallas_call(
        _head_kernel,
        out_shape=jax.ShapeDtypeStruct((B, n_classes), jnp.float32),
        in_specs=[vmem] * 7,
        out_specs=vmem,
        compiler_params=pltpu.CompilerParams(
            vmem_limit_bytes=int(vmem_limit)),
        cost_estimate=pl.CostEstimate(
            flops=int(hd_flops), transcendentals=int(B * n_classes),
            bytes_accessed=int(hd_bytes)),
    )(emb, gamma_p, beta_p, w1_p, params["b1"], params["w2"], params["b2"])
    return out


def init_params(key, c_in, e_in, d_vis, d_lang, fc_size):
    ks = jax.random.split(key, 4)
    scale = 0.05
    assert fc_size[0] == d_vis + d_lang
    return {
        "wv": scale * jax.random.normal(ks[0], (c_in, d_vis), jnp.float32),
        "bv": jnp.zeros((1, d_vis), jnp.float32),
        "wl": scale * jax.random.normal(ks[1], (e_in, d_lang), jnp.float32),
        "bl": jnp.zeros((1, d_lang), jnp.float32),
        "gamma": jnp.ones((1, fc_size[0]), jnp.float32),
        "beta": jnp.zeros((1, fc_size[0]), jnp.float32),
        "w1": scale * jax.random.normal(ks[2], (fc_size[0], fc_size[1]), jnp.float32),
        "b1": jnp.zeros((1, fc_size[1]), jnp.float32),
        "w2": scale * jax.random.normal(ks[3], (fc_size[1], fc_size[2]), jnp.float32),
        "b2": jnp.zeros((1, fc_size[2]), jnp.float32),
    }


def reference_forward(img_x, txt_x, params):
    """Pure-JAX reference for a correctness spot check."""
    B, C, H, W = img_x.shape
    vis_feat = jnp.mean(img_x.reshape(B, C, H * W), axis=2)
    txt_feat = jnp.mean(txt_x, axis=1)
    vis_emb = vis_feat @ params["wv"] + params["bv"]
    lang_emb = txt_feat @ params["wl"] + params["bl"]
    x = jnp.concatenate([vis_emb, lang_emb], axis=1)
    mu = jnp.mean(x, axis=0, keepdims=True)
    var = jnp.mean((x - mu) ** 2, axis=0, keepdims=True)
    x = (x - mu) * jax.lax.rsqrt(var + 1e-5) * params["gamma"] + params["beta"]
    h = jnp.maximum(x @ params["w1"] + params["b1"], 0.0)
    h = jnp.maximum(h @ params["w2"] + params["b2"], 0.0)
    return jax.nn.softmax(h, axis=1)


if __name__ == "__main__":
    # Small deterministic shapes consistent with the forward pass.
    B, C, H, W = 16, 4, 32, 32         # image batch, NCHW (HW=1024)
    S, E = 8, 16                       # text: sequence length, token embedding
    D_VIS, D_LANG = 32, 32             # backbone embedding dims
    FC_SIZE = [D_VIS + D_LANG, 32, 8]  # classifier_params['fc_size'], act='ReLU'

    key = jax.random.PRNGKey(0)
    k_img, k_txt, k_par = jax.random.split(key, 3)

    img_x = jax.random.normal(k_img, (B, C, H, W), jnp.float32)
    txt_x = jax.random.normal(k_txt, (B, S, E), jnp.float32)
    params = init_params(k_par, C, E, D_VIS, D_LANG, FC_SIZE)

    out = model_forward(img_x, txt_x, params)
    out = jax.block_until_ready(out)

    assert out.shape == (B, FC_SIZE[-1])
    # rows of a softmax must sum to 1 (approx reciprocal -> loose tolerance)
    assert bool(jnp.allclose(jnp.sum(out, axis=1), 1.0, atol=1e-2))
    # spot-check against the pure-JAX reference (inputs rounded to bf16 to
    # compare against the same bf16-streamed data the kernel sees)
    img_q = img_x.astype(jnp.bfloat16).astype(jnp.float32)
    txt_q = txt_x.astype(jnp.bfloat16).astype(jnp.float32)
    ref = reference_forward(img_q, txt_q, params)
    assert bool(jnp.allclose(out, ref, atol=2e-2, rtol=2e-2))
    print("KERNEL_OK")
</pallas_src>

<mosaic_0001>
module attributes {stable_mosaic.version = 11 : i64} {
  func.func @_pool_project_kernel(%arg0: i32, %arg1: i32, %arg2: memref<8x8x512xbf16, #tpu.memory_space<vmem>>, %arg3: memref<8x128xbf16, #tpu.memory_space<vmem>>, %arg4: memref<8x128xf32, #tpu.memory_space<vmem>>, %arg5: memref<128x128xf32, #tpu.memory_space<vmem>>, %arg6: memref<1x128xf32, #tpu.memory_space<vmem>>, %arg7: memref<8x128xf32, #tpu.memory_space<vmem>>, %arg8: memref<8x8x128xf32, #tpu.memory_space<vmem>>) attributes {dimension_semantics = [#tpu.dimension_semantics<parallel>, #tpu.dimension_semantics<arbitrary>], iteration_bounds = array<i64: 2, 1>, scalar_prefetch = 0 : i64, scratch_operands = 1 : i64, tpu.core_type = #tpu.core_type<tc>, window_params = [{transform_indices = @transform_0, window_bounds = array<i64: 8, 8, 512>}, {transform_indices = @transform_1, window_bounds = array<i64: 8, 128>}, {pipeline_mode = #tpu.pipeline_mode<synchronous>, transform_indices = @transform_2, window_bounds = array<i64: 8, 128>}, {pipeline_mode = #tpu.pipeline_mode<synchronous>, transform_indices = @transform_3, window_bounds = array<i64: 128, 128>}, {pipeline_mode = #tpu.pipeline_mode<synchronous>, transform_indices = @transform_4, window_bounds = array<i64: 1, 128>}, {transform_indices = @transform_5, window_bounds = array<i64: 8, 128>}]} {
    %c0_i32 = arith.constant 0 : i32
    %0 = arith.cmpi eq, %arg1, %c0_i32 : i32
    %1 = arith.extui %0 : i1 to i32
    %c0_i32_0 = arith.constant 0 : i32
    %2 = arith.cmpi ne, %1, %c0_i32_0 : i32
    scf.if %2 {
      %cst = arith.constant 0.000000e+00 : f32
      %18 = vector.broadcast %cst : f32 to vector<8x8x128xf32>
      %c0_11 = arith.constant 0 : index
      %c0_12 = arith.constant 0 : index
      %c0_13 = arith.constant 0 : index
      %19 = vector.load %arg8[%c0_11, %c0_12, %c0_13] : memref<8x8x128xf32, #tpu.memory_space<vmem>>, vector<8x8x128xf32>
      tpu.vector_store %arg8[%c0_11, %c0_12, %c0_13], %18 {strides = array<i32>} : memref<8x8x128xf32, #tpu.memory_space<vmem>>, vector<8x8x128xf32>,
    } else {
    }
    %c0 = arith.constant 0 : index
    %c0_1 = arith.constant 0 : index
    %c0_2 = arith.constant 0 : index
    %3 = vector.load %arg2[%c0, %c0_1, %c0_2] : memref<8x8x512xbf16, #tpu.memory_space<vmem>>, vector<8x8x512xbf16>
    %4 = arith.extf %3 : vector<8x8x512xbf16> to vector<8x8x512xf32>
    %c0_3 = arith.constant 0 : index
    %c0_4 = arith.constant 0 : index
    %c0_5 = arith.constant 0 : index
    %5 = vector.load %arg8[%c0_3, %c0_4, %c0_5] : memref<8x8x128xf32, #tpu.memory_space<vmem>>, vector<8x8x128xf32>
    %6 = vector.extract_strided_slice %4 {offsets = [0, 0, 0], sizes = [8, 8, 128], strides = [1, 1, 1]} : vector<8x8x512xf32> to vector<8x8x128xf32>
    %7 = arith.addf %5, %6 : vector<8x8x128xf32>
    %8 = vector.extract_strided_slice %4 {offsets = [0, 0, 128], sizes = [8, 8, 128], strides = [1, 1, 1]} : vector<8x8x512xf32> to vector<8x8x128xf32>
    %9 = arith.addf %7, %8 : vector<8x8x128xf32>
    %10 = vector.extract_strided_slice %4 {offsets = [0, 0, 256], sizes = [8, 8, 128], strides = [1, 1, 1]} : vector<8x8x512xf32> to vector<8x8x128xf32>
    %11 = arith.addf %9, %10 : vector<8x8x128xf32>
    %12 = vector.extract_strided_slice %4 {offsets = [0, 0, 384], sizes = [8, 8, 128], strides = [1, 1, 1]} : vector<8x8x512xf32> to vector<8x8x128xf32>
    %13 = arith.addf %11, %12 : vector<8x8x128xf32>
    %c0_6 = arith.constant 0 : index
    %c0_7 = arith.constant 0 : index
    %c0_8 = arith.constant 0 : index
    %14 = vector.load %arg8[%c0_6, %c0_7, %c0_8] : memref<8x8x128xf32, #tpu.memory_space<vmem>>, vector<8x8x128xf32>
    tpu.vector_store %arg8[%c0_6, %c0_7, %c0_8], %13 {strides = array<i32>} : memref<8x8x128xf32, #tpu.memory_space<vmem>>, vector<8x8x128xf32>,
    %c0_i32_9 = arith.constant 0 : i32
    %15 = arith.cmpi eq, %arg1, %c0_i32_9 : i32
    %16 = arith.extui %15 : i1 to i32
    %c0_i32_10 = arith.constant 0 : i32
    %17 = arith.cmpi ne, %16, %c0_i32_10 : i32
    scf.if %17 {
      %c0_11 = arith.constant 0 : index
      %c0_12 = arith.constant 0 : index
      %c0_13 = arith.constant 0 : index
      %18 = vector.load %arg8[%c0_11, %c0_12, %c0_13] : memref<8x8x128xf32, #tpu.memory_space<vmem>>, vector<8x8x128xf32>
      %cst = arith.constant dense<0.000000e+00> : vector<8x8xf32>
      %19 = vector.multi_reduction <add>, %18, %cst [2] : vector<8x8x128xf32> to vector<8x8xf32>
      %c0_14 = arith.constant 0 : index
      %c0_15 = arith.constant 0 : index
      %20 = vector.load %arg3[%c0_14, %c0_15] : memref<8x128xbf16, #tpu.memory_space<vmem>>, vector<8x128xbf16>
      %21 = arith.extf %20 : vector<8x128xbf16> to vector<8x128xf32>
      %c0_16 = arith.constant 0 : index
      %c0_17 = arith.constant 0 : index
      %22 = vector.load %arg4[%c0_16, %c0_17] : memref<8x128xf32, #tpu.memory_space<vmem>>, vector<8x128xf32>
      %cst_18 = arith.constant dense<0.000000e+00> : vector<8x128xf32>
      %23 = tpu.matmul %19, %22, %cst_18 {dimension_numbers = #tpu.dot_dimension_numbers<[1], [0], [0], [1], [0, 0, 1, 1], [], []>} : vector<8x8xf32>, vector<8x128xf32>, vector<8x128xf32> -> vector<8x128xf32>
      %c0_19 = arith.constant 0 : index
      %c0_20 = arith.constant 0 : index
      %24 = vector.load %arg5[%c0_19, %c0_20] : memref<128x128xf32, #tpu.memory_space<vmem>>, vector<128x128xf32>
      %cst_21 = arith.constant dense<0.000000e+00> : vector<8x128xf32>
      %25 = tpu.matmul %21, %24, %cst_21 {dimension_numbers = #tpu.dot_dimension_numbers<[1], [0], [0], [1], [0, 0, 1, 1], [], []>} : vector<8x128xf32>, vector<128x128xf32>, vector<8x128xf32> -> vector<8x128xf32>
      %26 = arith.addf %23, %25 : vector<8x128xf32>
      %c0_22 = arith.constant 0 : index
      %c0_23 = arith.constant 0 : index
      %27 = vector.load %arg6[%c0_22, %c0_23] : memref<1x128xf32, #tpu.memory_space<vmem>>, vector<1x128xf32>
      %28 = vector.broadcast %27 : vector<1x128xf32> to vector<8x128xf32>
      %29 = arith.addf %26, %28 : vector<8x128xf32>
      %c0_24 = arith.constant 0 : index
      %c0_25 = arith.constant 0 : index
      %30 = vector.load %arg7[%c0_24, %c0_25] : memref<8x128xf32, #tpu.memory_space<vmem>>, vector<8x128xf32>
      tpu.vector_store %arg7[%c0_24, %c0_25], %29 {strides = array<i32>} : memref<8x128xf32, #tpu.memory_space<vmem>>, vector<8x128xf32>,
    } else {
    }
    return
  }
  func.func @transform_0(%arg0: i32, %arg1: i32) -> (i32, i32, i32) {
    %c0_i32 = arith.constant 0 : i32
    %c0_i32_0 = arith.constant 0 : i32
    return %arg0, %c0_i32, %arg1 : i32, i32, i32
  }
  func.func @transform_1(%arg0: i32, %arg1: i32) -> (i32, i32) {
    %c0_i32 = arith.constant 0 : i32
    %c0_i32_0 = arith.constant 0 : i32
    return %arg0, %c0_i32 : i32, i32
  }
  func.func @transform_2(%arg0: i32, %arg1: i32) -> (i32, i32) {
    %c0_i32 = arith.constant 0 : i32
    %c0_i32_0 = arith.constant 0 : i32
    %c0_i32_1 = arith.constant 0 : i32
    return %c0_i32, %c0_i32_0 : i32, i32
  }
  func.func @transform_3(%arg0: i32, %arg1: i32) -> (i32, i32) {
    %c0_i32 = arith.constant 0 : i32
    %c0_i32_0 = arith.constant 0 : i32
    %c0_i32_1 = arith.constant 0 : i32
    return %c0_i32, %c0_i32_0 : i32, i32
  }
  func.func @transform_4(%arg0: i32, %arg1: i32) -> (i32, i32) {
    %c0_i32 = arith.constant 0 : i32
    %c0_i32_0 = arith.constant 0 : i32
    %c0_i32_1 = arith.constant 0 : i32
    return %c0_i32, %c0_i32_0 : i32, i32
  }
  func.func @transform_5(%arg0: i32, %arg1: i32) -> (i32, i32) {
    %c0_i32 = arith.constant 0 : i32
    %c0_i32_0 = arith.constant 0 : i32
    return %arg0, %c0_i32 : i32, i32
  }
}

</mosaic_0001>

<llo_original>
// kernel: tpu_custom_call.1
$region0: #{tpu_custom_call.1}
  #allocation0 [shape = 'u32[]', space=smem, size = 0x4, offset = 0x4, fixed_abs, tag = 'smem constant byte address 0x4 - core index']
  #allocation1 [shape = 'u32[144,128]{1,0:T(1,128)}', space=vmem, size = 0x12000, scoped, tag = 'internal scratch']
  #allocation2 [shape = 'f32[8,8,128]{2,1,0:T(8,128)}', space=vmem, size = 0x8000, scoped, tag = 'scratch operand']
  %s0 = inlined_call_operand.hbm [shape: bf16[16,8,512], index: 0, kind: input, shape index: {}]
  %s1 = inlined_call_operand.hbm [shape: bf16[16,128], index: 1, kind: input, shape index: {}]
  %s2 = inlined_call_operand.hbm [shape: f32[8,128], index: 2, kind: input, shape index: {}]
  %s3 = inlined_call_operand.hbm [shape: f32[128,128], index: 3, kind: input, shape index: {}]
  %s4 = inlined_call_operand.vmem [shape: f32[1,128], index: 4, kind: input, shape index: {}]
  %s5 = inlined_call_operand.hbm [shape: f32[16,128], index: 5, kind: output, shape index: {}]
  %s6 = sld [smem:[#allocation0]]
  $region77: #{tpu_custom_call.1} parent=0
    _
  %s8 = ssub.s32 1, %s6
  %s9 = scalar_select 0, %s8, %s6
  $region1: #{tpu_custom_call.1} parent=0
    #allocation3 [shape = 'u8[131072]{0}', space=vmem, size = 0x20000, scoped, tag = 'input window, operand 0']
    #allocation4 [shape = 's32[2]{0}', space=sflag, size = 0x8, scoped, tag = 'scoped memory for tpu_custom_call.1']
    #allocation5 [shape = 's32[2]{0}', space=sflag, size = 0x8, scoped, tag = 'scoped memory for tpu_custom_call.1']
    #allocation6 [shape = 'u8[4096]{0}', space=vmem, size = 0x1000, scoped, tag = 'input window, operand 1']
    #allocation7 [shape = 's32[2]{0}', space=sflag, size = 0x8, scoped, tag = 'scoped memory for tpu_custom_call.1']
    #allocation8 [shape = 'u8[4096]{0}', space=vmem, size = 0x1000, scoped, tag = 'input window, operand 2, single buffered']
    #allocation9 [shape = 'u8[65536]{0}', space=vmem, size = 0x10000, scoped, tag = 'input window, operand 3, single buffered']
    #allocation10 [shape = 's32[1]{0}', space=sflag, size = 0x4, scoped, tag = 'scoped memory for tpu_custom_call.1']
    #allocation11 [shape = 'u8[8192]{0}', space=vmem, size = 0x2000, scoped, tag = 'output window, operand 0']
    %10 = vsyncpa [#allocation4], 0
    %s11 = scalar_lea.sflag [#allocation4], 1
    %12 = vsyncpa %s11, 0
    %13 = vsyncpa [#allocation7], 0
    %s14 = scalar_lea.sflag [#allocation7], 1
    %15 = vsyncpa %s14, 0
    %16 = vsyncpa [#allocation10], 0
    %17 = vsyncpa [#allocation5], 0
    %s18 = scalar_lea.sflag [#allocation5], 1
    %19 = vsyncpa %s18, 0
    loop: start=0, step=1, limit=4
    $region2: #{tpu_custom_call.1} parent=1 // loop_pre_header
      _
    $region3: #{tpu_custom_call.1} parent=1 // loop_header
      %s21 = sphi 0, %s25
      %p22 = scmp.ge.s32.totalorder %s21, 4
      %s28 = sphi 0, %s40
      %s29 = sphi 0, %s36
      %s30 = sphi 0, %s28
      %s31 = sphi 0, %s29
      %s32 = sphi 0, %s30
      %s33 = sphi 0, %s31
      %s45 = sphi 0, %s47
      %s48 = sphi 0, %s45
      %s49 = sphi 0, %s48
      %s65 = sphi 0, %s49
      %s71 = sphi 0, %s73
      %s74 = sphi 0, %s71
      %s75 = sphi 0, %s74
      %s91 = sphi 0, %s75
      %s95 = sphi 0, %s95
      %s97 = sphi 0, %s95
      %s98 = sphi 0, %s97
      %s112 = sphi 0, %s98
      %s116 = sphi 0, %s116
      %s118 = sphi 0, %s116
      %s119 = sphi 0, %s118
      %s133 = sphi 0, %s119
      %s137 = sphi 0, %s137
      %s139 = sphi 0, %s137
      %s140 = sphi 0, %s139
      %s154 = sphi 0, %s140
      %s160 = sphi 0, %s162
      %s163 = sphi 0, %s160
      %s164 = sphi 0, %s163
      %s180 = sphi 0, %s164
    $region4: #{tpu_custom_call.1} parent=1 // loop_header_branch
      %24 = sbr.rel (%p22) target = $region8
    $region5: #{tpu_custom_call.1} parent=1 // loop_body
      %s26 = ssub.s32 %s21, 1
      %s27 = ssub.s32 %s21, 2
      %s34 = sadd.s32 1, %s29
      %p35 = scmp.ge.s32.totalorder %s34, 1
      %s36 = scalar_select %p35, 0, %s34
      %s37 = sadd.s32 1, %s28
      %s38 = scalar_select %p35, %s37, %s28
      %p39 = scmp.ge.s32.totalorder %s38, 2
      %s40 = scalar_select %p39, 0, %s38
      %s41 = ssub.s32 %s28, %s40
      %s42 = ssub.s32 %s29, %s36
      %s43 = sor.u32 %s41, %s42
      %p44 = scmp.eq.s32.totalorder %s43, 0
      %s46 = sadd.s32 %s45, 1
      %s47 = scalar_select %p44, %s45, %s46
      %p50 = pneg %p44
      %p51 = scmp.eq.s32.totalorder %s21, 1
      %p52 = por %p50, %p51
      %p53 = scmp.ne.s32.totalorder %s45, %s48
      %p54 = scmp.eq.s32.totalorder %s21, 0
      %p55 = por %p53, %p54
      %p56 = scmp.ne.s32.totalorder %s45, %s48
      %p57 = scmp.eq.s32.totalorder %s26, 1
      %p58 = por %p56, %p57
      %p59 = scmp.ne.s32.totalorder %s48, %s49
      %p60 = scmp.eq.s32.totalorder %s26, 0
      %p61 = por %p59, %p60
      %p62 = scmp.ne.s32.totalorder %s48, %s49
      %p63 = scmp.eq.s32.totalorder %s27, 1
      %p64 = por %p62, %p63
      %p66 = scmp.ne.s32.totalorder %s49, %s65
      %p67 = scmp.eq.s32.totalorder %s27, 0
      %p68 = por %p66, %p67
      %s69 = ssub.s32 %s28, %s40
      %p70 = scmp.eq.s32.totalorder %s69, 0
      %s72 = sadd.s32 %s71, 1
      %s73 = scalar_select %p70, %s71, %s72
      %p76 = pneg %p70
      %p77 = scmp.eq.s32.totalorder %s21, 1
      %p78 = por %p76, %p77
      %p79 = scmp.ne.s32.totalorder %s71, %s74
      %p80 = scmp.eq.s32.totalorder %s21, 0
      %p81 = por %p79, %p80
      %p82 = scmp.ne.s32.totalorder %s71, %s74
      %p83 = scmp.eq.s32.totalorder %s26, 1
      %p84 = por %p82, %p83
      %p85 = scmp.ne.s32.totalorder %s74, %s75
      %p86 = scmp.eq.s32.totalorder %s26, 0
      %p87 = por %p85, %p86
      %p88 = scmp.ne.s32.totalorder %s74, %s75
      %p89 = scmp.eq.s32.totalorder %s27, 1
      %p90 = por %p88, %p89
      %p92 = scmp.ne.s32.totalorder %s75, %s91
      %p93 = scmp.eq.s32.totalorder %s27, 0
      %p94 = por %p92, %p93
      %s96 = sadd.s32 %s95, 1
      %p99 = scmp.eq.s32.totalorder %s21, 1
      %p100 = scmp.ne.s32.totalorder %s95, %s97
      %p101 = scmp.eq.s32.totalorder %s21, 0
      %p102 = por %p100, %p101
      %p103 = scmp.ne.s32.totalorder %s95, %s97
      %p104 = scmp.eq.s32.totalorder %s26, 1
      %p105 = por %p103, %p104
      %p106 = scmp.ne.s32.totalorder %s97, %s98
      %p107 = scmp.eq.s32.totalorder %s26, 0
      %p108 = por %p106, %p107
      %p109 = scmp.ne.s32.totalorder %s97, %s98
      %p110 = scmp.eq.s32.totalorder %s27, 1
      %p111 = por %p109, %p110
      %p113 = scmp.ne.s32.totalorder %s98, %s112
      %p114 = scmp.eq.s32.totalorder %s27, 0
      %p115 = por %p113, %p114
      %s117 = sadd.s32 %s116, 1
      %p120 = scmp.eq.s32.totalorder %s21, 1
      %p121 = scmp.ne.s32.totalorder %s116, %s118
      %p122 = scmp.eq.s32.totalorder %s21, 0
      %p123 = por %p121, %p122
      %p124 = scmp.ne.s32.totalorder %s116, %s118
      %p125 = scmp.eq.s32.totalorder %s26, 1
      %p126 = por %p124, %p125
      %p127 = scmp.ne.s32.totalorder %s118, %s119
      %p128 = scmp.eq.s32.totalorder %s26, 0
      %p129 = por %p127, %p128
      %p130 = scmp.ne.s32.totalorder %s118, %s119
      %p131 = scmp.eq.s32.totalorder %s27, 1
      %p132 = por %p130, %p131
      %p134 = scmp.ne.s32.totalorder %s119, %s133
      %p135 = scmp.eq.s32.totalorder %s27, 0
      %p136 = por %p134, %p135
      %s138 = sadd.s32 %s137, 1
      %p141 = scmp.eq.s32.totalorder %s21, 1
      %p142 = scmp.ne.s32.totalorder %s137, %s139
      %p143 = scmp.eq.s32.totalorder %s21, 0
      %p144 = por %p142, %p143
      %p145 = scmp.ne.s32.totalorder %s137, %s139
      %p146 = scmp.eq.s32.totalorder %s26, 1
      %p147 = por %p145, %p146
      %p148 = scmp.ne.s32.totalorder %s139, %s140
      %p149 = scmp.eq.s32.totalorder %s26, 0
      %p150 = por %p148, %p149
      %p151 = scmp.ne.s32.totalorder %s139, %s140
      %p152 = scmp.eq.s32.totalorder %s27, 1
      %p153 = por %p151, %p152
      %p155 = scmp.ne.s32.totalorder %s140, %s154
      %p156 = scmp.eq.s32.totalorder %s27, 0
      %p157 = por %p155, %p156
      %s158 = ssub.s32 %s28, %s40
      %p159 = scmp.eq.s32.totalorder %s158, 0
      %s161 = sadd.s32 %s160, 1
      %s162 = scalar_select %p159, %s160, %s161
      %p165 = pneg %p159
      %p166 = scmp.eq.s32.totalorder %s21, 1
      %p167 = por %p165, %p166
      %p168 = scmp.ne.s32.totalorder %s160, %s163
      %p169 = scmp.eq.s32.totalorder %s21, 0
      %p170 = por %p168, %p169
      %p171 = scmp.ne.s32.totalorder %s160, %s163
      %p172 = scmp.eq.s32.totalorder %s26, 1
      %p173 = por %p171, %p172
      %p174 = scmp.ne.s32.totalorder %s163, %s164
      %p175 = scmp.eq.s32.totalorder %s26, 0
      %p176 = por %p174, %p175
      %p177 = scmp.ne.s32.totalorder %s163, %s164
      %p178 = scmp.eq.s32.totalorder %s27, 1
      %p179 = por %p177, %p178
      %p181 = scmp.ne.s32.totalorder %s164, %s180
      %p182 = scmp.eq.s32.totalorder %s27, 0
      %p183 = por %p181, %p182
      %p184 = scmp.le.s32.totalorder 1, %s21
      %p185 = scmp.lt.s32.totalorder %s21, 3
      %p186 = pnand %p184, %p185
      %p187 = pneg %p186
      // Predicated region
      $region9: #{tpu_custom_call.1} parent=5 // pred_check
        _
      $region10: #{tpu_custom_call.1} parent=5 // pred_check_branch
        %189 = sbr.rel (%p186) target = $region12
      $region11: #{tpu_custom_call.1} parent=5 // pred_region
        %s190 = ssub.s32 %s21, 1
        // Predicated region
        $region13: #{tpu_custom_call.1} parent=11 // pred_check
          %p191 = pneg %p108
        $region14: #{tpu_custom_call.1} parent=11 // pred_check_branch
          %193 = sbr.rel (%p191) target = $region16
        $region15: #{tpu_custom_call.1} parent=11 // pred_region
          %s195 = ssub.s32 128, 128
          %196 = vsyncadd [#allocation7], %s195
          %s198 = sshll.u32 [#allocation8], 4
          %s199 = int_to_ptr.vmem [resolvable:$true] %s198
          %201 = dma.hbm_to_vmem [thread:$0]  %s2, 128, %s199, [#allocation7]
        $region16: #{tpu_custom_call.1} parent=11 // pred_fallthru
          _
        // Predicated region
        $region17: #{tpu_custom_call.1} parent=11 // pred_check
          %p202 = pneg %p129
        $region18: #{tpu_custom_call.1} parent=11 // pred_check_branch
          %204 = sbr.rel (%p202) target = $region20
        $region19: #{tpu_custom_call.1} parent=11 // pred_region
          %s206 = ssub.s32 2048, 2048
          %207 = vsyncadd [#allocation10], %s206
          %s208 = sshll.u32 [#allocation9], 4
          %s209 = int_to_ptr.vmem [resolvable:$true] %s208
          %214 = dma.hbm_to_vmem [thread:$0]  %s3, 2048, %s209, [#allocation10], 128, 128, 8
        $region20: #{tpu_custom_call.1} parent=11 // pred_fallthru
          _
        // Predicated region
        $region21: #{tpu_custom_call.1} parent=11 // pred_check
          %p215 = pneg %p150
        $region22: #{tpu_custom_call.1} parent=11 // pred_check_branch
          %217 = sbr.rel (%p215) target = $region24
        $region23: #{tpu_custom_call.1} parent=11 // pred_region
          _
        $region24: #{tpu_custom_call.1} parent=11 // pred_fallthru
          _
      $region12: #{tpu_custom_call.1} parent=5 // pred_fallthru
        _
      %p218 = scmp.lt.s32.totalorder %s21, 2
      // Predicated region
      $region25: #{tpu_custom_call.1} parent=5 // pred_check
        %p219 = pneg %p218
      $region26: #{tpu_custom_call.1} parent=5 // pred_check_branch
        %221 = sbr.rel (%p219) target = $region28
      $region27: #{tpu_custom_call.1} parent=5 // pred_region
        // Predicated region
        $region29: #{tpu_custom_call.1} parent=27 // pred_check
          %p222 = pneg %p55
        $region30: #{tpu_custom_call.1} parent=27 // pred_check_branch
          %224 = sbr.rel (%p222) target = $region32
        $region31: #{tpu_custom_call.1} parent=27 // pred_region
          %s225 = sand.u32 %s45, 1
          %s226 = scalar_lea.sflag [#allocation4], %s225
          %s227 = sand.u32 %s45, 1
          %s228 = smul.addr %s227, 128
          %s229 = scalar_lea.vmem [#allocation3], %s228
          %s230 = smul.u32 8, %s28
          %s231 = smul.u32 4, %s29
          %s233 = ssub.s32 2048, 2048
          %234 = vsyncadd %s226, %s233
          %s235 = smul.addr %s230, 4
          %s236 = sadd.s32 %s231, %s235
          %s237 = smul.addr %s236, 64
          %s238 = scalar_lea.hbm %s0, %s237
          %s239 = sshll.u32 %s229, 4
          %s240 = int_to_ptr.vmem [resolvable:$true] %s239
          %245 = dma.hbm_to_vmem [thread:$0]  %s238, 2048, %s240, %s226, 256, 256, 16
        $region32: #{tpu_custom_call.1} parent=27 // pred_fallthru
          _
        // Predicated region
        $region33: #{tpu_custom_call.1} parent=27 // pred_check
          %p246 = pneg %p81
        $region34: #{tpu_custom_call.1} parent=27 // pred_check_branch
          %248 = sbr.rel (%p246) target = $region36
        $region35: #{tpu_custom_call.1} parent=27 // pred_region
          %s249 = sand.u32 %s21, 1
          %s250 = scalar_lea.sflag [#allocation7], %s249
          %s251 = sand.u32 %s71, 1
          %s252 = smul.addr %s251, 4
          %s253 = scalar_lea.vmem [#allocation6], %s252
          %s255 = ssub.s32 64, 64
          %256 = vsyncadd %s250, %s255
          %s257 = smul.addr %s28, 64
          %s258 = scalar_lea.hbm %s1, %s257
          %s260 = sshll.u32 %s253, 4
          %s261 = int_to_ptr.vmem [resolvable:$true] %s260
          %263 = dma.hbm_to_vmem [thread:$0]  %s258, 64, %s261, %s250
        $region36: #{tpu_custom_call.1} parent=27 // pred_fallthru
          _
      $region28: #{tpu_custom_call.1} parent=5 // pred_fallthru
        _
      %p264 = scmp.le.s32.totalorder 1, %s21
      %p265 = scmp.lt.s32.totalorder %s21, 3
      %p266 = pnand %p264, %p265
      %p267 = pneg %p266
      // Predicated region
      $region37: #{tpu_custom_call.1} parent=5 // pred_check
        _
      $region38: #{tpu_custom_call.1} parent=5 // pred_check_branch
        %269 = sbr.rel (%p266) target = $region40
      $region39: #{tpu_custom_call.1} parent=5 // pred_region
        %s270 = ssub.s32 %s21, 1
        %s271 = sand.u32 %s48, 1
        %s272 = scalar_lea.sflag [#allocation4], %s271
        %s273 = sand.u32 %s48, 1
        %s274 = smul.addr %s273, 128
        %s275 = scalar_lea.vmem [#allocation3], %s274
        // Predicated region
        $region41: #{tpu_custom_call.1} parent=39 // pred_check
          %p276 = pneg %p61
        $region42: #{tpu_custom_call.1} parent=39 // pred_check_branch
          %278 = sbr.rel (%p276) target = $region44
        $region43: #{tpu_custom_call.1} parent=39 // pred_region
          %279 = dma.done %s272, 2048
        $region44: #{tpu_custom_call.1} parent=39 // pred_fallthru
          _
        %s280 = sand.u32 %s26, 1
        %s281 = scalar_lea.sflag [#allocation7], %s280
        %s282 = sand.u32 %s74, 1
        %s283 = smul.addr %s282, 4
        %s284 = scalar_lea.vmem [#allocation6], %s283
        // Predicated region
        $region45: #{tpu_custom_call.1} parent=39 // pred_check
          %p285 = pneg %p87
        $region46: #{tpu_custom_call.1} parent=39 // pred_check_branch
          %287 = sbr.rel (%p285) target = $region48
        $region47: #{tpu_custom_call.1} parent=39 // pred_region
          %288 = dma.done %s281, 64
        $region48: #{tpu_custom_call.1} parent=39 // pred_fallthru
          _
        // Predicated region
        $region49: #{tpu_custom_call.1} parent=39 // pred_check
          %p289 = pneg %p108
        $region50: #{tpu_custom_call.1} parent=39 // pred_check_branch
          %291 = sbr.rel (%p289) target = $region52
        $region51: #{tpu_custom_call.1} parent=39 // pred_region
          %292 = dma.done [#allocation7], 128
        $region52: #{tpu_custom_call.1} parent=39 // pred_fallthru
          _
        // Predicated region
        $region53: #{tpu_custom_call.1} parent=39 // pred_check
          %p293 = pneg %p129
        $region54: #{tpu_custom_call.1} parent=39 // pred_check_branch
          %295 = sbr.rel (%p293) target = $region56
        $region55: #{tpu_custom_call.1} parent=39 // pred_region
          %296 = dma.done [#allocation10], 2048
        $region56: #{tpu_custom_call.1} parent=39 // pred_fallthru
          _
        %s297 = sand.u32 %s48, 1
        %s298 = scalar_lea.sflag [#allocation4], %s297
        %s299 = sand.u32 %s48, 1
        %s300 = smul.addr %s299, 128
        %s301 = scalar_lea.vmem [#allocation3], %s300
        %p302 = pneg %p61
        %p303 = pneg %p58
        %s304 = sand.u32 %s26, 1
        %s305 = scalar_lea.sflag [#allocation7], %s304
        %s306 = sand.u32 %s74, 1
        %s307 = smul.addr %s306, 4
        %s308 = scalar_lea.vmem [#allocation6], %s307
        %p309 = pneg %p87
        %p310 = pneg %p84
        %p311 = pneg %p108
        %p312 = pneg %p105
        %p313 = pneg %p129
        %p314 = pneg %p126
        %p315 = pneg %p150
        %p316 = pneg %p147
        %p317 = pneg %p176
        %p318 = pneg %p173
        %s319 = sand.u32 %s163, 1
        %s320 = scalar_lea.sflag [#allocation5], %s319
        %s321 = sand.u32 %s163, 1
        %s322 = smul.addr %s321, 8
        %s323 = scalar_lea.vmem [#allocation11], %s322
        %s324 = smul.u32 8, %s30
        %s325 = smul.u32 4, %s31
        %p326 = scmp.eq.s32.totalorder %s31, 0
        // Predicated region
        $region57: #{tpu_custom_call.1} parent=39 // pred_check
          %p327 = pneg %p326
        $region58: #{tpu_custom_call.1} parent=39 // pred_check_branch
          %329 = sbr.rel (%p327) target = $region60
        $region59: #{tpu_custom_call.1} parent=39 // pred_region
          %330 = vst [vmem:[#allocation2] sm:$0xff] 0.0
          %331 = vst [vmem:[#allocation2 + $0x8] sm:$0xff] 0.0
          %332 = vst [vmem:[#allocation2 + $0x10] sm:$0xff] 0.0
          %333 = vst [vmem:[#allocation2 + $0x18] sm:$0xff] 0.0
          %334 = vst [vmem:[#allocation2 + $0x20] sm:$0xff] 0.0
          %335 = vst [vmem:[#allocation2 + $0x28] sm:$0xff] 0.0
          %336 = vst [vmem:[#allocation2 + $0x30] sm:$0xff] 0.0
          %337 = vst [vmem:[#allocation2 + $0x38] sm:$0xff] 0.0
        $region60: #{tpu_custom_call.1} parent=39 // pred_fallthru
          _
        %v338 = vld [vmem:[%s275] sm:$0xff]
        %v339 = vld [vmem:[%s275 + $0x8] sm:$0xff]
        %v340 = vld [vmem:[%s275 + $0x10] sm:$0xff]
        %v341 = vld [vmem:[%s275 + $0x18] sm:$0xff]
        %v342 = vld [vmem:[%s275 + $0x20] sm:$0xff]
        %v343 = vld [vmem:[%s275 + $0x28] sm:$0xff]
        %v344 = vld [vmem:[%s275 + $0x30] sm:$0xff]
        %v345 = vld [vmem:[%s275 + $0x38] sm:$0xff]
        %v346 = vld [vmem:[%s275 + $0x40] sm:$0xff]
        %v347 = vld [vmem:[%s275 + $0x48] sm:$0xff]
        %v348 = vld [vmem:[%s275 + $0x50] sm:$0xff]
        %v349 = vld [vmem:[%s275 + $0x58] sm:$0xff]
        %v350 = vld [vmem:[%s275 + $0x60] sm:$0xff]
        %v351 = vld [vmem:[%s275 + $0x68] sm:$0xff]
        %v352 = vld [vmem:[%s275 + $0x70] sm:$0xff]
        %v353 = vld [vmem:[%s275 + $0x78] sm:$0xff]
        %v354 = vunpack.c.l.bf16 %v338
        %v355 = vunpack.c.h.bf16 %v338
        %v356 = vunpack.c.l.bf16 %v339
        %v357 = vunpack.c.h.bf16 %v339
        %v358 = vunpack.c.l.bf16 %v340
        %v359 = vunpack.c.h.bf16 %v340
        %v360 = vunpack.c.l.bf16 %v341
        %v361 = vunpack.c.h.bf16 %v341
        %v362 = vunpack.c.l.bf16 %v342
        %v363 = vunpack.c.h.bf16 %v342
        %v364 = vunpack.c.l.bf16 %v343
        %v365 = vunpack.c.h.bf16 %v343
        %v366 = vunpack.c.l.bf16 %v344
        %v367 = vunpack.c.h.bf16 %v344
        %v368 = vunpack.c.l.bf16 %v345
        %v369 = vunpack.c.h.bf16 %v345
        %v370 = vunpack.c.l.bf16 %v346
        %v371 = vunpack.c.h.bf16 %v346
        %v372 = vunpack.c.l.bf16 %v347
        %v373 = vunpack.c.h.bf16 %v347
        %v374 = vunpack.c.l.bf16 %v348
        %v375 = vunpack.c.h.bf16 %v348
        %v376 = vunpack.c.l.bf16 %v349
        %v377 = vunpack.c.h.bf16 %v349
        %v378 = vunpack.c.l.bf16 %v350
        %v379 = vunpack.c.h.bf16 %v350
        %v380 = vunpack.c.l.bf16 %v351
        %v381 = vunpack.c.h.bf16 %v351
        %v382 = vunpack.c.l.bf16 %v352
        %v383 = vunpack.c.h.bf16 %v352
        %v384 = vunpack.c.l.bf16 %v353
        %v385 = vunpack.c.h.bf16 %v353
        %v386 = vld [vmem:[#allocation2] sm:$0xff]
        %v387 = vld [vmem:[#allocation2 + $0x8] sm:$0xff]
        %v388 = vld [vmem:[#allocation2 + $0x10] sm:$0xff]
        %v389 = vld [vmem:[#allocation2 + $0x18] sm:$0xff]
        %v390 = vld [vmem:[#allocation2 + $0x20] sm:$0xff]
        %v391 = vld [vmem:[#allocation2 + $0x28] sm:$0xff]
        %v392 = vld [vmem:[#allocation2 + $0x30] sm:$0xff]
        %v393 = vld [vmem:[#allocation2 + $0x38] sm:$0xff]
        %v394 = vadd.f32 %v386, %v354
        %v395 = vadd.f32 %v387, %v358
        %v396 = vadd.f32 %v388, %v362
        %v397 = vadd.f32 %v389, %v366
        %v398 = vadd.f32 %v390, %v370
        %v399 = vadd.f32 %v391, %v374
        %v400 = vadd.f32 %v392, %v378
        %v401 = vadd.f32 %v393, %v382
        %v402 = vadd.f32 %v394, %v355
        %v403 = vadd.f32 %v395, %v359
        %v404 = vadd.f32 %v396, %v363
        %v405 = vadd.f32 %v397, %v367
        %v406 = vadd.f32 %v398, %v371
        %v407 = vadd.f32 %v399, %v375
        %v408 = vadd.f32 %v400, %v379
        %v409 = vadd.f32 %v401, %v383
        %v410 = vadd.f32 %v402, %v356
        %v411 = vadd.f32 %v403, %v360
        %v412 = vadd.f32 %v404, %v364
        %v413 = vadd.f32 %v405, %v368
        %v414 = vadd.f32 %v406, %v372
        %v415 = vadd.f32 %v407, %v376
        %v416 = vadd.f32 %v408, %v380
        %v417 = vadd.f32 %v409, %v384
        %v418 = vadd.f32 %v410, %v357
        %v419 = vadd.f32 %v411, %v361
        %v420 = vadd.f32 %v412, %v365
        %v421 = vadd.f32 %v413, %v369
        %v422 = vadd.f32 %v414, %v373
        %v423 = vadd.f32 %v415, %v377
        %v424 = vadd.f32 %v416, %v381
        %v425 = vadd.f32 %v417, %v385
        %426 = vst [vmem:[#allocation2] sm:$0xff] %v418
        %427 = vst [vmem:[#allocation2 + $0x8] sm:$0xff] %v419
        %428 = vst [vmem:[#allocation2 + $0x10] sm:$0xff] %v420
        %429 = vst [vmem:[#allocation2 + $0x18] sm:$0xff] %v421
        %430 = vst [vmem:[#allocation2 + $0x20] sm:$0xff] %v422
        %431 = vst [vmem:[#allocation2 + $0x28] sm:$0xff] %v423
        %432 = vst [vmem:[#allocation2 + $0x30] sm:$0xff] %v424
        %433 = vst [vmem:[#allocation2 + $0x38] sm:$0xff] %v425
        // Predicated region
        $region61: #{tpu_custom_call.1} parent=39 // pred_check
          %p434 = pneg %p326
        $region62: #{tpu_custom_call.1} parent=39 // pred_check_branch
          %436 = sbr.rel (%p434) target = $region64
        $region63: #{tpu_custom_call.1} parent=39 // pred_region
          %v437 = vld [vmem:[#allocation2] sm:$0xff]
          %v438 = vld [vmem:[#allocation2 + $0x8] sm:$0xff]
          %v439 = vld [vmem:[#allocation2 + $0x10] sm:$0xff]
          %v440 = vld [vmem:[#allocation2 + $0x18] sm:$0xff]
          %v441 = vld [vmem:[#allocation2 + $0x20] sm:$0xff]
          %v442 = vld [vmem:[#allocation2 + $0x28] sm:$0xff]
          %v443 = vld [vmem:[#allocation2 + $0x30] sm:$0xff]
          %v444 = vld [vmem:[#allocation2 + $0x38] sm:$0xff]
          %445 = vadd.xlane.f32.xlu0 %v437
          %v446 = vpop.xlane.xlu0 %445
          %447 = vadd.xlane.f32.xlu0 %v438
          %v448 = vpop.xlane.xlu0 %447
          %449 = vadd.xlane.f32.xlu0 %v439
          %v450 = vpop.xlane.xlu0 %449
          %451 = vadd.xlane.f32.xlu0 %v440
          %v452 = vpop.xlane.xlu0 %451
          %453 = vadd.xlane.f32.xlu0 %v441
          %v454 = vpop.xlane.xlu0 %453
          %455 = vadd.xlane.f32.xlu0 %v442
          %v456 = vpop.xlane.xlu0 %455
          %457 = vadd.xlane.f32.xlu0 %v443
          %v458 = vpop.xlane.xlu0 %457
          %459 = vadd.xlane.f32.xlu0 %v444
          %v460 = vpop.xlane.xlu0 %459
          %v461 = vld [vmem:[%s284] sm:$0xf]
          %v462 = vunpack.c.l.bf16 %v461
          %v463 = vld [vmem:[#allocation8] sm:$0xff]
          %v464 = vld [vmem:[#allocation9] sm:$0xff]
          %v465 = vld [vmem:[#allocation9 + $0x8] sm:$0xff]
          %v466 = vld [vmem:[#allocation9 + $0x10] sm:$0xff]
          %v467 = vld [vmem:[#allocation9 + $0x18] sm:$0xff]
          %v468 = vld [vmem:[#allocation9 + $0x20] sm:$0xff]
          %v469 = vld [vmem:[#allocation9 + $0x28] sm:$0xff]
          %v470 = vld [vmem:[#allocation9 + $0x30] sm:$0xff]
          %v471 = vld [vmem:[#allocation9 + $0x38] sm:$0xff]
          %v472 = vld [vmem:[#allocation9 + $0x40] sm:$0xff]
          %v473 = vld [vmem:[#allocation9 + $0x48] sm:$0xff]
          %v474 = vld [vmem:[#allocation9 + $0x50] sm:$0xff]
          %v475 = vld [vmem:[#allocation9 + $0x58] sm:$0xff]
          %v476 = vld [vmem:[#allocation9 + $0x60] sm:$0xff]
          %v477 = vld [vmem:[#allocation9 + $0x68] sm:$0xff]
          %v478 = vld [vmem:[#allocation9 + $0x70] sm:$0xff]
          %v479 = vld [vmem:[#allocation9 + $0x78] sm:$0xff]
          %480 = vmatprep.subr.mxu0 0.0
          %481 = vmatpush1.msra.mxu0 %v479
          %482 = vmatprep.subr.mxu0 0.0
          %483 = vmatpush1.msra.mxu0 %v478
          %484 = vmatprep.subr.mxu0 0.0
          %485 = vmatpush1.msra.mxu0 %v477
          %486 = vmatprep.subr.mxu0 0.0
          %487 = vmatpush1.msra.mxu0 %v476
          %488 = vmatprep.subr.mxu0 0.0
          %489 = vmatpush1.msra.mxu0 %v475
          %490 = vmatprep.subr.mxu0 0.0
          %491 = vmatpush1.msra.mxu0 %v474
          %492 = vmatprep.subr.mxu0 0.0
          %493 = vmatpush1.msra.mxu0 %v473
          %494 = vmatprep.subr.mxu0 0.0
          %495 = vmatpush1.msra.mxu0 %v472
          %496 = vmatprep.subr.mxu0 0.0
          %497 = vmatpush1.msra.mxu0 %v471
          %498 = vmatprep.subr.mxu0 0.0
          %499 = vmatpush1.msra.mxu0 %v470
          %500 = vmatprep.subr.mxu0 0.0
          %501 = vmatpush1.msra.mxu0 %v469
          %502 = vmatprep.subr.mxu0 0.0
          %503 = vmatpush1.msra.mxu0 %v468
          %504 = vmatprep.subr.mxu0 0.0
          %505 = vmatpush1.msra.mxu0 %v467
          %506 = vmatprep.subr.mxu0 0.0
          %507 = vmatpush1.msra.mxu0 %v466
          %508 = vmatprep.subr.mxu0 0.0
          %509 = vmatpush1.msra.mxu0 %v465
          %510 = vmatprep.subr.mxu0 0.0
          %511 = vmatpush1.msra.mxu0 %v464
          %512 = vmatprep.subr.mxu0 0.0
          %513 = vmatpush2.msra.mxu0 0.0
          %514 = vmatprep.subr.mxu0 0.0
          %515 = vmatpush2.msra.mxu0 0.0
          %516 = vmatprep.subr.mxu0 0.0
          %517 = vmatpush2.msra.mxu0 0.0
          %518 = vmatprep.subr.mxu0 0.0
          %519 = vmatpush2.msra.mxu0 0.0
          %520 = vmatprep.subr.mxu0 0.0
          %521 = vmatpush2.msra.mxu0 0.0
          %522 = vmatprep.subr.mxu0 0.0
          %523 = vmatpush2.msra.mxu0 0.0
          %524 = vmatprep.subr.mxu0 0.0
          %525 = vmatpush2.msra.mxu0 0.0
          %526 = vmatprep.subr.mxu0 0.0
          %527 = vmatpush2.msra.mxu0 0.0
          %528 = vmatprep.subr.mxu0 0.0
          %529 = vmatpush2.msra.mxu0 0.0
          %530 = vmatprep.subr.mxu0 0.0
          %531 = vmatpush2.msra.mxu0 0.0
          %532 = vmatprep.subr.mxu0 0.0
          %533 = vmatpush2.msra.mxu0 0.0
          %534 = vmatprep.subr.mxu0 0.0
          %535 = vmatpush2.msra.mxu0 0.0
          %536 = vmatprep.subr.mxu0 0.0
          %537 = vmatpush2.msra.mxu0 0.0
          %538 = vmatprep.subr.mxu0 0.0
          %539 = vmatpush2.msra.mxu0 0.0
          %540 = vmatprep.subr.mxu0 0.0
          %541 = vmatpush2.msra.mxu0 0.0
          %542 = vmatprep.subr.mxu0 0.0
          %543 = vmatpush2.msra.mxu0 0.0
          %544 = vmatprep.mubr.f32.mxu0 0.0
          %545 = vmatmul.mubr.f32.gmra.mxu0 %v462
          %v546 = vpop.f32.mrf.mxu0
          %v547 = vadd.f32 0.0, %v546
          %v548 = vpop.f32.mrf.mxu0
          %549 = vdwg.mxu0
          %v558 = vlaneseq
          %v559 = vand.u32 %v558, 127
          %v560 = vlaneseq
          %v561 = vshrl.u32 %v560, 7
          %v562 = vsub.s32 %v559, %v561
          %v563 = vrot.slane %v446, %v562
          %v564 = vlaneseq
          %v565 = vshrl.u32 %v564, 7
          %v566 = vsub.s32 %v559, %v565
          %v567 = vrot.slane %v448, %v566
          %v568 = vlaneseq
          %v569 = vshrl.u32 %v568, 7
          %v570 = vsub.s32 %v559, %v569
          %v571 = vrot.slane %v450, %v570
          %v572 = vlaneseq
          %v573 = vshrl.u32 %v572, 7
          %v574 = vsub.s32 %v559, %v573
          %v575 = vrot.slane %v452, %v574
          %v576 = vlaneseq
          %v577 = vshrl.u32 %v576, 7
          %v578 = vsub.s32 %v559, %v577
          %v579 = vrot.slane %v454, %v578
          %v580 = vlaneseq
          %v581 = vshrl.u32 %v580, 7
          %v582 = vsub.s32 %v559, %v581
          %v583 = vrot.slane %v456, %v582
          %v584 = vlaneseq
          %v585 = vshrl.u32 %v584, 7
          %v586 = vsub.s32 %v559, %v585
          %v587 = vrot.slane %v458, %v586
          %v588 = vlaneseq
          %v589 = vshrl.u32 %v588, 7
          %v590 = vsub.s32 %v559, %v589
          %v591 = vrot.slane %v460, %v590
          %vm592 = vcmask 1041409
          %v593 = vsel %vm592, %v567, %v563
          %vm594 = vcmask 1042434
          %v595 = vsel %vm594, %v571, %v593
          %vm596 = vcmask 1043459
          %v597 = vsel %vm596, %v575, %v595
          %vm598 = vcmask 1044484
          %v599 = vsel %vm598, %v579, %v597
          %vm600 = vcmask 1045509
          %v601 = vsel %vm600, %v583, %v599
          %vm602 = vcmask 1046534
          %v603 = vsel %vm602, %v587, %v601
          %vm604 = vcmask 1047559
          %v605 = vsel %vm604, %v591, %v603
          %vm606 = vcmask 64512
          %v607 = vsel %vm606, %v605, 0
          %609 = vmatprep.subr.mxu0 0.0
          %610 = vmatpush1.msra.mxu0 0.0
          %611 = vmatprep.subr.mxu0 0.0
          %612 = vmatpush1.msra.mxu0 0.0
          %613 = vmatprep.subr.mxu0 0.0
          %614 = vmatpush1.msra.mxu0 0.0
          %615 = vmatprep.subr.mxu0 0.0
          %616 = vmatpush1.msra.mxu0 0.0
          %617 = vmatprep.subr.mxu0 0.0
          %618 = vmatpush1.msra.mxu0 0.0
          %619 = vmatprep.subr.mxu0 0.0
          %620 = vmatpush1.msra.mxu0 0.0
          %621 = vmatprep.subr.mxu0 0.0
          %622 = vmatpush1.msra.mxu0 0.0
          %623 = vmatprep.subr.mxu0 0.0
          %624 = vmatpush1.msra.mxu0 0.0
          %625 = vmatprep.subr.mxu0 0.0
          %626 = vmatpush1.msra.mxu0 0.0
          %627 = vmatprep.subr.mxu0 0.0
          %628 = vmatpush1.msra.mxu0 0.0
          %629 = vmatprep.subr.mxu0 0.0
          %630 = vmatpush1.msra.mxu0 0.0
          %631 = vmatprep.subr.mxu0 0.0
          %632 = vmatpush1.msra.mxu0 0.0
          %633 = vmatprep.subr.mxu0 0.0
          %634 = vmatpush1.msra.mxu0 0.0
          %635 = vmatprep.subr.mxu0 0.0
          %636 = vmatpush1.msra.mxu0 0.0
          %637 = vmatprep.subr.mxu0 0.0
          %638 = vmatpush1.msra.mxu0 0.0
          %639 = vmatprep.subr.mxu0 0.0
          %640 = vmatpush1.msra.mxu0 %v463
          %641 = vmatprep.subr.mxu0 0.0
          %642 = vmatpush2.msra.mxu0 0.0
          %643 = vmatprep.subr.mxu0 0.0
          %644 = vmatpush2.msra.mxu0 0.0
          %645 = vmatprep.subr.mxu0 0.0
          %646 = vmatpush2.msra.mxu0 0.0
          %647 = vmatprep.subr.mxu0 0.0
          %648 = vmatpush2.msra.mxu0 0.0
          %649 = vmatprep.subr.mxu0 0.0
          %650 = vmatpush2.msra.mxu0 0.0
          %651 = vmatprep.subr.mxu0 0.0
          %652 = vmatpush2.msra.mxu0 0.0
          %653 = vmatprep.subr.mxu0 0.0
          %654 = vmatpush2.msra.mxu0 0.0
          %655 = vmatprep.subr.mxu0 0.0
          %656 = vmatpush2.msra.mxu0 0.0
          %657 = vmatprep.subr.mxu0 0.0
          %658 = vmatpush2.msra.mxu0 0.0
          %659 = vmatprep.subr.mxu0 0.0
          %660 = vmatpush2.msra.mxu0 0.0
          %661 = vmatprep.subr.mxu0 0.0
          %662 = vmatpush2.msra.mxu0 0.0
          %663 = vmatprep.subr.mxu0 0.0
          %664 = vmatpush2.msra.mxu0 0.0
          %665 = vmatprep.subr.mxu0 0.0
          %666 = vmatpush2.msra.mxu0 0.0
          %667 = vmatprep.subr.mxu0 0.0
          %668 = vmatpush2.msra.mxu0 0.0
          %669 = vmatprep.subr.mxu0 0.0
          %670 = vmatpush2.msra.mxu0 0.0
          %671 = vmatprep.subr.mxu0 0.0
          %672 = vmatpush2.msra.mxu0 0.0
          %673 = vmatprep.mubr.f32.mxu0 0.0
          %674 = vmatmul.mubr.f32.gmra.mxu0 %v607
          %v675 = vpop.f32.mrf.mxu0
          %v676 = vadd.f32 %v547, %v675
          %v677 = vpop.f32.mrf.mxu0
          %678 = vdwg.mxu0
          %v679 = vld [vmem:[%s4] sm:$0x1]
          %v681 = vlaneseq
          %v682 = vshrl.u32 %v681, 7
          %v683 = vsub.s32 0, %v682
          %v684 = vrot.slane %v679, %v683
          %v686 = vadd.f32 %v676, %v684
          %687 = vst [vmem:[%s323] sm:$0xff] %v686
        $region64: #{tpu_custom_call.1} parent=39 // pred_fallthru
          _
        %s688 = sand.u32 %s163, 1
        %s689 = scalar_lea.sflag [#allocation5], %s688
        %s690 = sand.u32 %s163, 1
        %s691 = smul.addr %s690, 8
        %s692 = scalar_lea.vmem [#allocation11], %s691
        // Predicated region
        $region65: #{tpu_custom_call.1} parent=39 // pred_check
          %p693 = pneg %p173
        $region66: #{tpu_custom_call.1} parent=39 // pred_check_branch
          %695 = sbr.rel (%p693) target = $region68
        $region67: #{tpu_custom_call.1} parent=39 // pred_region
          %s697 = ssub.s32 128, 128
          %698 = vsyncadd %s689, %s697
          %s699 = smul.addr %s30, 128
          %s700 = scalar_lea.hbm %s5, %s699
          %s702 = sshll.u32 %s692, 4
          %s703 = int_to_ptr.vmem [resolvable:$true] %s702
          %705 = dma.vmem_to_hbm [thread:$0]  %s703, 128, %s700, %s689
        $region68: #{tpu_custom_call.1} parent=39 // pred_fallthru
          _
      $region40: #{tpu_custom_call.1} parent=5 // pred_fallthru
        _
      %p706 = scmp.le.s32.totalorder 2, %s21
      // Predicated region
      $region69: #{tpu_custom_call.1} parent=5 // pred_check
        %p707 = pneg %p706
      $region70: #{tpu_custom_call.1} parent=5 // pred_check_branch
        %709 = sbr.rel (%p707) target = $region72
      $region71: #{tpu_custom_call.1} parent=5 // pred_region
        %s710 = ssub.s32 %s21, 2
        // Predicated region
        $region73: #{tpu_custom_call.1} parent=71 // pred_check
          %p711 = pneg %p179
        $region74: #{tpu_custom_call.1} parent=71 // pred_check_branch
          %713 = sbr.rel (%p711) target = $region76
        $region75: #{tpu_custom_call.1} parent=71 // pred_region
          %s714 = sand.u32 %s164, 1
          %s715 = scalar_lea.sflag [#allocation5], %s714
          %s716 = sand.u32 %s164, 1
          %s717 = smul.addr %s716, 8
          %s718 = scalar_lea.vmem [#allocation11], %s717
          %719 = dma.done %s715, 128
        $region76: #{tpu_custom_call.1} parent=71 // pred_fallthru
          _
      $region72: #{tpu_custom_call.1} parent=5 // pred_fallthru
        _
    $region6: #{tpu_custom_call.1} parent=1 // loop_footer
      %s25 = sadd.s32 1, %s21
    $region7: #{tpu_custom_call.1} parent=1 // loop_footer_branch
      %20 = sbr.rel target = $region3
    $region8: #{tpu_custom_call.1} parent=1 // loop_exit
      _
    %720 = vsyncpa [#allocation4], 1
    %s721 = scalar_lea.sflag [#allocation4], 1
    %722 = vsyncpa %s721, 1
    %723 = vsyncpa [#allocation7], 1
    %s724 = scalar_lea.sflag [#allocation7], 1
    %725 = vsyncpa %s724, 1
    %726 = vsyncpa [#allocation10], 1
    %727 = vsyncpa [#allocation5], 1
    %s728 = scalar_lea.sflag [#allocation5], 1
    %729 = vsyncpa %s728, 1

</llo_original>
